<compile_context>
chip_gen: v7x
topology: tpu7x:2x2x1
jax: 0.10.0
libtpu: 0.0.40
codegen_flags: <defaults>
</compile_context>

<pallas_src>
import jax
import jax.numpy as jnp
from jax.experimental import pallas as pl
from jax.experimental.pallas import tpu as pltpu

MEMORY_SIZE = 1
IN_DIM = 8 * MEMORY_SIZE
H1, H2, OUT = 16, 32, 4
TILE_B = 512          # batch tile for large batches (sublane-aligned, VMEM-trivial)


def _actor_kernel(x_ref, w1_ref, b1_ref, w2_ref, b2_ref, w3_ref, b3_ref, o_ref):
    x = x_ref[...]                                                      # (tb, IN_DIM)

    h1 = jnp.tanh(
        jnp.dot(x, w1_ref[...], preferred_element_type=jnp.float32) + b1_ref[...]
    )                                                                   # (tb, H1)
    h2 = jnp.tanh(
        jnp.dot(h1, w2_ref[...], preferred_element_type=jnp.float32) + b2_ref[...]
    )                                                                   # (tb, H2)
    h3 = jnp.tanh(
        jnp.dot(h2, w3_ref[...], preferred_element_type=jnp.float32) + b3_ref[...]
    )                                                                   # (tb, OUT)

    # Softmax over the 4 real output features per row (== torch Softmax(0) on the
    # flat 4-vector). Exact normalization so downstream log-probs/ratios are safe.
    m = jnp.max(h3, axis=-1, keepdims=True)
    e = jnp.exp(h3 - m)
    denom = jnp.sum(e, axis=-1, keepdims=True)
    o_ref[...] = e / denom


def actor_net_forward_batched(states, params, *, tile_b=TILE_B):
    """states: (B, ...) with 8*MEMORY_SIZE elements per sample. Returns (B, 4) probs."""
    B = states.shape[0]
    x = states.reshape(B, IN_DIM).astype(jnp.float32)
    w1, b1, w2, b2, w3, b3 = params

    # Small batches: one rounded-to-8 tile (no over-padding). Large batches: 512-row
    # tiles; the resulting multi-step grid lets the "parallel" axis split across both
    # TensorCores on v7x (harmless single-TC loop on v5e/v6e).
    if B <= tile_b:
        tb = max(8, pl.cdiv(B, 8) * 8)
    else:
        tb = tile_b
    bp = pl.cdiv(B, tb) * tb
    if bp != B:
        x = jnp.pad(x, ((0, bp - B), (0, 0)))
    grid = (bp // tb,)

    # Weights/biases: constant index_map -> VMEM-resident across all grid steps.
    full = lambda shape: pl.BlockSpec(shape, lambda i: (0,) * len(shape))

    cost = pl.CostEstimate(
        flops=2 * bp * (IN_DIM * H1 + H1 * H2 + H2 * OUT),
        transcendentals=bp * (H1 + H2 + OUT + OUT),          # tanh x3 layers + exp
        bytes_accessed=bp * (IN_DIM + OUT) * 4
        + 4 * (IN_DIM * H1 + H1 + H1 * H2 + H2 + H2 * OUT + OUT),
    )

    out = pl.pallas_call(
        _actor_kernel,
        out_shape=jax.ShapeDtypeStruct((bp, OUT), jnp.float32),
        grid=grid,
        in_specs=[
            pl.BlockSpec((tb, IN_DIM), lambda i: (i, 0)),
            full((IN_DIM, H1)), full((1, H1)),
            full((H1, H2)), full((1, H2)),
            full((H2, OUT)), full((1, OUT)),
        ],
        out_specs=pl.BlockSpec((tb, OUT), lambda i: (i, 0)),
        compiler_params=pltpu.CompilerParams(
            dimension_semantics=("parallel",),
        ),
        cost_estimate=cost,
    )(x, w1, b1, w2, b2, w3, b3)

    return out[:B]


def actor_net_forward(state, params):
    """Original single-sample actor_net.forward semantics.

    At B=1 a pallas_call is pure launch latency for nanoseconds of math, so this
    path is a fused XLA expression (identical math); batch work should use
    actor_net_forward_batched."""
    x = state.reshape(IN_DIM).astype(jnp.float32)
    w1, b1, w2, b2, w3, b3 = params
    h = jnp.tanh(x @ w1 + b1.reshape(-1))
    h = jnp.tanh(h @ w2 + b2.reshape(-1))
    h = jnp.tanh(h @ w3 + b3.reshape(-1))
    return jax.nn.softmax(h, axis=0)


def init_params(key):
    """nn.Linear-style init U(-1/sqrt(fan_in), 1/sqrt(fan_in)).
    Weights stored as (in_features, out_features); biases as (1, out_features)."""
    def linear(k, fan_in, fan_out):
        kw, kb = jax.random.split(k)
        bound = 1.0 / jnp.sqrt(fan_in)
        w = jax.random.uniform(kw, (fan_in, fan_out), jnp.float32, -bound, bound)
        b = jax.random.uniform(kb, (1, fan_out), jnp.float32, -bound, bound)
        return w, b

    k1, k2, k3 = jax.random.split(key, 3)
    w1, b1 = linear(k1, IN_DIM, H1)
    w2, b2 = linear(k2, H1, H2)
    w3, b3 = linear(k3, H2, OUT)
    return (w1, b1, w2, b2, w3, b3)


def _reference_single(state, params):
    """Pure-JAX reference reproducing the PyTorch forward on one state."""
    x = state.reshape(IN_DIM)
    w1, b1, w2, b2, w3, b3 = params
    h = jnp.tanh(x @ w1 + b1.reshape(-1))
    h = jnp.tanh(h @ w2 + b2.reshape(-1))
    h = jnp.tanh(h @ w3 + b3.reshape(-1))
    return jax.nn.softmax(h, axis=0)


if __name__ == "__main__":
    key = jax.random.PRNGKey(0)
    k_params, k_state = jax.random.split(key)
    params = init_params(k_params)

    # A small batch of states; each state is (memory_size, 8) observations.
    B = 64
    states = jax.random.normal(k_state, (B, MEMORY_SIZE, 8), dtype=jnp.float32)

    probs = actor_net_forward_batched(states, params)
    jax.block_until_ready(probs)

    ref = jax.vmap(lambda s: _reference_single(s, params))(states)
    assert probs.shape == (B, OUT)
    assert jnp.allclose(probs, ref, atol=1e-5), float(jnp.max(jnp.abs(probs - ref)))
    assert jnp.allclose(jnp.sum(probs, axis=-1), 1.0, atol=1e-5)

    # Exercise the multi-tile grid path too (padded, multi-step grid).
    B2 = 1100
    states2 = jax.random.normal(jax.random.PRNGKey(1), (B2, MEMORY_SIZE, 8), jnp.float32)
    probs2 = actor_net_forward_batched(states2, params)
    jax.block_until_ready(probs2)
    ref2 = jax.vmap(lambda s: _reference_single(s, params))(states2)
    assert probs2.shape == (B2, OUT)
    assert jnp.allclose(probs2, ref2, atol=1e-5)

    # Single-sample path (original module semantics) agrees as well.
    single = actor_net_forward(states[0], params)
    jax.block_until_ready(single)
    assert single.shape == (OUT,)
    assert jnp.allclose(single, ref[0], atol=1e-5)

    print("KERNEL_OK")
</pallas_src>

<mosaic_0001>
module attributes {stable_mosaic.version = 11 : i64} {
  func.func @_actor_kernel(%arg0: i32, %arg1: memref<64x8xf32, #tpu.memory_space<vmem>>, %arg2: memref<8x16xf32, #tpu.memory_space<vmem>>, %arg3: memref<1x16xf32, #tpu.memory_space<vmem>>, %arg4: memref<16x32xf32, #tpu.memory_space<vmem>>, %arg5: memref<1x32xf32, #tpu.memory_space<vmem>>, %arg6: memref<32x4xf32, #tpu.memory_space<vmem>>, %arg7: memref<1x4xf32, #tpu.memory_space<vmem>>, %arg8: memref<64x4xf32, #tpu.memory_space<vmem>>) attributes {dimension_semantics = [#tpu.dimension_semantics<parallel>], iteration_bounds = array<i64: 1>, scalar_prefetch = 0 : i64, scratch_operands = 0 : i64, tpu.core_type = #tpu.core_type<tc>, window_params = [{transform_indices = @transform_0, window_bounds = array<i64: 64, 8>}, {pipeline_mode = #tpu.pipeline_mode<synchronous>, transform_indices = @transform_1, window_bounds = array<i64: 8, 16>}, {pipeline_mode = #tpu.pipeline_mode<synchronous>, transform_indices = @transform_2, window_bounds = array<i64: 1, 16>}, {pipeline_mode = #tpu.pipeline_mode<synchronous>, transform_indices = @transform_3, window_bounds = array<i64: 16, 32>}, {pipeline_mode = #tpu.pipeline_mode<synchronous>, transform_indices = @transform_4, window_bounds = array<i64: 1, 32>}, {pipeline_mode = #tpu.pipeline_mode<synchronous>, transform_indices = @transform_5, window_bounds = array<i64: 32, 4>}, {pipeline_mode = #tpu.pipeline_mode<synchronous>, transform_indices = @transform_6, window_bounds = array<i64: 1, 4>}, {transform_indices = @transform_7, window_bounds = array<i64: 64, 4>}]} {
    %c0 = arith.constant 0 : index
    %c0_0 = arith.constant 0 : index
    %0 = vector.load %arg1[%c0, %c0_0] : memref<64x8xf32, #tpu.memory_space<vmem>>, vector<64x8xf32>
    %c0_1 = arith.constant 0 : index
    %c0_2 = arith.constant 0 : index
    %1 = vector.load %arg2[%c0_1, %c0_2] : memref<8x16xf32, #tpu.memory_space<vmem>>, vector<8x16xf32>
    %cst = arith.constant dense<0.000000e+00> : vector<64x16xf32>
    %2 = tpu.matmul %0, %1, %cst {dimension_numbers = #tpu.dot_dimension_numbers<[1], [0], [0], [1], [0, 0, 1, 1], [], []>} : vector<64x8xf32>, vector<8x16xf32>, vector<64x16xf32> -> vector<64x16xf32>
    %c0_3 = arith.constant 0 : index
    %c0_4 = arith.constant 0 : index
    %3 = vector.load %arg3[%c0_3, %c0_4] : memref<1x16xf32, #tpu.memory_space<vmem>>, vector<1x16xf32>
    %4 = vector.broadcast %3 : vector<1x16xf32> to vector<64x16xf32>
    %5 = arith.addf %2, %4 : vector<64x16xf32>
    %6 = math.tanh %5 : vector<64x16xf32>
    %c0_5 = arith.constant 0 : index
    %c0_6 = arith.constant 0 : index
    %7 = vector.load %arg4[%c0_5, %c0_6] : memref<16x32xf32, #tpu.memory_space<vmem>>, vector<16x32xf32>
    %cst_7 = arith.constant dense<0.000000e+00> : vector<64x32xf32>
    %8 = tpu.matmul %6, %7, %cst_7 {dimension_numbers = #tpu.dot_dimension_numbers<[1], [0], [0], [1], [0, 0, 1, 1], [], []>} : vector<64x16xf32>, vector<16x32xf32>, vector<64x32xf32> -> vector<64x32xf32>
    %c0_8 = arith.constant 0 : index
    %c0_9 = arith.constant 0 : index
    %9 = vector.load %arg5[%c0_8, %c0_9] : memref<1x32xf32, #tpu.memory_space<vmem>>, vector<1x32xf32>
    %10 = vector.broadcast %9 : vector<1x32xf32> to vector<64x32xf32>
    %11 = arith.addf %8, %10 : vector<64x32xf32>
    %12 = math.tanh %11 : vector<64x32xf32>
    %c0_10 = arith.constant 0 : index
    %c0_11 = arith.constant 0 : index
    %13 = vector.load %arg6[%c0_10, %c0_11] : memref<32x4xf32, #tpu.memory_space<vmem>>, vector<32x4xf32>
    %cst_12 = arith.constant dense<0.000000e+00> : vector<64x4xf32>
    %14 = tpu.matmul %12, %13, %cst_12 {dimension_numbers = #tpu.dot_dimension_numbers<[1], [0], [0], [1], [0, 0, 1, 1], [], []>} : vector<64x32xf32>, vector<32x4xf32>, vector<64x4xf32> -> vector<64x4xf32>
    %c0_13 = arith.constant 0 : index
    %c0_14 = arith.constant 0 : index
    %15 = vector.load %arg7[%c0_13, %c0_14] : memref<1x4xf32, #tpu.memory_space<vmem>>, vector<1x4xf32>
    %16 = vector.broadcast %15 : vector<1x4xf32> to vector<64x4xf32>
    %17 = arith.addf %14, %16 : vector<64x4xf32>
    %18 = math.tanh %17 : vector<64x4xf32>
    %cst_15 = arith.constant dense<0xFF800000> : vector<64xf32>
    %19 = vector.multi_reduction <maximumf>, %18, %cst_15 [1] : vector<64x4xf32> to vector<64xf32>
    %20 = vector.shape_cast %19 : vector<64xf32> to vector<64x1xf32>
    %21 = vector.broadcast %20 : vector<64x1xf32> to vector<64x4xf32>
    %22 = arith.subf %18, %21 : vector<64x4xf32>
    %23 = math.exp %22 : vector<64x4xf32>
    %cst_16 = arith.constant dense<0.000000e+00> : vector<64xf32>
    %24 = vector.multi_reduction <add>, %23, %cst_16 [1] : vector<64x4xf32> to vector<64xf32>
    %25 = vector.shape_cast %24 : vector<64xf32> to vector<64x1xf32>
    %26 = vector.broadcast %25 : vector<64x1xf32> to vector<64x4xf32>
    %27 = arith.divf %23, %26 : vector<64x4xf32>
    %c0_17 = arith.constant 0 : index
    %c0_18 = arith.constant 0 : index
    %28 = vector.load %arg8[%c0_17, %c0_18] : memref<64x4xf32, #tpu.memory_space<vmem>>, vector<64x4xf32>
    tpu.vector_store %arg8[%c0_17, %c0_18], %27 {strides = array<i32>} : memref<64x4xf32, #tpu.memory_space<vmem>>, vector<64x4xf32>,
    return
  }
  func.func @transform_0(%arg0: i32) -> (i32, i32) {
    %c0_i32 = arith.constant 0 : i32
    %c0_i32_0 = arith.constant 0 : i32
    return %arg0, %c0_i32 : i32, i32
  }
  func.func @transform_1(%arg0: i32) -> (i32, i32) {
    %c0_i32 = arith.constant 0 : i32
    %c0_i32_0 = arith.constant 0 : i32
    %c0_i32_1 = arith.constant 0 : i32
    return %c0_i32, %c0_i32_0 : i32, i32
  }
  func.func @transform_2(%arg0: i32) -> (i32, i32) {
    %c0_i32 = arith.constant 0 : i32
    %c0_i32_0 = arith.constant 0 : i32
    %c0_i32_1 = arith.constant 0 : i32
    return %c0_i32, %c0_i32_0 : i32, i32
  }
  func.func @transform_3(%arg0: i32) -> (i32, i32) {
    %c0_i32 = arith.constant 0 : i32
    %c0_i32_0 = arith.constant 0 : i32
    %c0_i32_1 = arith.constant 0 : i32
    return %c0_i32, %c0_i32_0 : i32, i32
  }
  func.func @transform_4(%arg0: i32) -> (i32, i32) {
    %c0_i32 = arith.constant 0 : i32
    %c0_i32_0 = arith.constant 0 : i32
    %c0_i32_1 = arith.constant 0 : i32
    return %c0_i32, %c0_i32_0 : i32, i32
  }
  func.func @transform_5(%arg0: i32) -> (i32, i32) {
    %c0_i32 = arith.constant 0 : i32
    %c0_i32_0 = arith.constant 0 : i32
    %c0_i32_1 = arith.constant 0 : i32
    return %c0_i32, %c0_i32_0 : i32, i32
  }
  func.func @transform_6(%arg0: i32) -> (i32, i32) {
    %c0_i32 = arith.constant 0 : i32
    %c0_i32_0 = arith.constant 0 : i32
    %c0_i32_1 = arith.constant 0 : i32
    return %c0_i32, %c0_i32_0 : i32, i32
  }
  func.func @transform_7(%arg0: i32) -> (i32, i32) {
    %c0_i32 = arith.constant 0 : i32
    %c0_i32_0 = arith.constant 0 : i32
    return %arg0, %c0_i32 : i32, i32
  }
}

</mosaic_0001>

<llo_original>
// kernel: tpu_custom_call.1
$region0: #{tpu_custom_call.1}
  #allocation0 [shape = 'u32[]', space=smem, size = 0x4, offset = 0x4, fixed_abs, tag = 'smem constant byte address 0x4 - core index']
  #allocation1 [shape = 'u32[144,128]{1,0:T(1,128)}', space=vmem, size = 0x12000, scoped, tag = 'internal scratch']
  %s0 = inlined_call_operand.vmem [shape: f32[64,8], index: 0, kind: input, shape index: {}]
  %s1 = inlined_call_operand.vmem [shape: f32[8,16], index: 1, kind: input, shape index: {}]
  %s2 = inlined_call_operand.vmem [shape: f32[1,16], index: 2, kind: input, shape index: {}]
  %s3 = inlined_call_operand.vmem [shape: f32[16,32], index: 3, kind: input, shape index: {}]
  %s4 = inlined_call_operand.vmem [shape: f32[1,32], index: 4, kind: input, shape index: {}]
  %s5 = inlined_call_operand.vmem [shape: f32[32,4], index: 5, kind: input, shape index: {}]
  %s6 = inlined_call_operand.vmem [shape: f32[1,4], index: 6, kind: input, shape index: {}]
  %s7 = inlined_call_operand.vmem [shape: f32[64,4], index: 7, kind: output, shape index: {}]
  %s8 = sld [smem:[#allocation0]]
  $region38: #{tpu_custom_call.1} parent=0
    _
  %s10 = ssub.s32 1, %s8
  %s11 = scalar_select 0, %s10, %s8
  // Predicated region
  $region2: #{tpu_custom_call.1} parent=0 // pred_check
    _
  $region3: #{tpu_custom_call.1} parent=0 // pred_check_branch
    %13 = sbr.rel (0) target = $region5
  $region4: #{tpu_custom_call.1} parent=0 // pred_region
    _
  $region5: #{tpu_custom_call.1} parent=0 // pred_fallthru
    _
  // Predicated region
  $region6: #{tpu_custom_call.1} parent=0 // pred_check
    _
  $region7: #{tpu_custom_call.1} parent=0 // pred_check_branch
    %15 = sbr.rel (0) target = $region9
  $region8: #{tpu_custom_call.1} parent=0 // pred_region
    _
  $region9: #{tpu_custom_call.1} parent=0 // pred_fallthru
    _
  // Predicated region
  $region10: #{tpu_custom_call.1} parent=0 // pred_check
    _
  $region11: #{tpu_custom_call.1} parent=0 // pred_check_branch
    %17 = sbr.rel (0) target = $region13
  $region12: #{tpu_custom_call.1} parent=0 // pred_region
    _
  $region13: #{tpu_custom_call.1} parent=0 // pred_fallthru
    _
  // Predicated region
  $region14: #{tpu_custom_call.1} parent=0 // pred_check
    _
  $region15: #{tpu_custom_call.1} parent=0 // pred_check_branch
    %19 = sbr.rel (0) target = $region17
  $region16: #{tpu_custom_call.1} parent=0 // pred_region
    _
  $region17: #{tpu_custom_call.1} parent=0 // pred_fallthru
    _
  // Predicated region
  $region18: #{tpu_custom_call.1} parent=0 // pred_check
    _
  $region19: #{tpu_custom_call.1} parent=0 // pred_check_branch
    %21 = sbr.rel (0) target = $region21
  $region20: #{tpu_custom_call.1} parent=0 // pred_region
    _
  $region21: #{tpu_custom_call.1} parent=0 // pred_fallthru
    _
  // Predicated region
  $region22: #{tpu_custom_call.1} parent=0 // pred_check
    _
  $region23: #{tpu_custom_call.1} parent=0 // pred_check_branch
    %23 = sbr.rel (0) target = $region25
  $region24: #{tpu_custom_call.1} parent=0 // pred_region
    _
  $region25: #{tpu_custom_call.1} parent=0 // pred_fallthru
    _
  // Predicated region
  $region26: #{tpu_custom_call.1} parent=0 // pred_check
    _
  $region27: #{tpu_custom_call.1} parent=0 // pred_check_branch
    %25 = sbr.rel (0) target = $region29
  $region28: #{tpu_custom_call.1} parent=0 // pred_region
    _
  $region29: #{tpu_custom_call.1} parent=0 // pred_fallthru
    _
  %v26 = vld [vmem:[%s0] sm:$0xff]
  %v27 = vld [vmem:[%s0 + $0x8] sm:$0xff]
  %v28 = vld [vmem:[%s0 + $0x10] sm:$0xff]
  %v29 = vld [vmem:[%s0 + $0x18] sm:$0xff]
  %v30 = vld [vmem:[%s0 + $0x20] sm:$0xff]
  %v31 = vld [vmem:[%s0 + $0x28] sm:$0xff]
  %v32 = vld [vmem:[%s0 + $0x30] sm:$0xff]
  %v33 = vld [vmem:[%s0 + $0x38] sm:$0xff]
  %v34 = vld [vmem:[%s1] sm:$0xff]
  %v35 = vld [vmem:[%s2] sm:$0x1]
  %v37 = vlaneseq
  %v38 = vshrl.u32 %v37, 7
  %v39 = vsub.s32 0, %v38
  %v40 = vrot.slane %v35, %v39
  %vm42 = vcmask 64512
  %v44 = vsel %vm42, %v26, 0
  %v47 = vsel %vm42, %v27, 0
  %v50 = vsel %vm42, %v28, 0
  %v53 = vsel %vm42, %v29, 0
  %v56 = vsel %vm42, %v30, 0
  %v59 = vsel %vm42, %v31, 0
  %v62 = vsel %vm42, %v32, 0
  %v65 = vsel %vm42, %v33, 0
  %67 = vmatprep.subr.mxu0 0.0
  %68 = vmatpush1.msra.mxu0 %v34
  %69 = vmatprep.subr.mxu0 0.0
  %70 = vmatpush1.msra.mxu0 0.0
  %71 = vmatprep.subr.mxu0 0.0
  %72 = vmatpush1.msra.mxu0 0.0
  %73 = vmatprep.subr.mxu0 0.0
  %74 = vmatpush1.msra.mxu0 0.0
  %75 = vmatprep.subr.mxu0 0.0
  %76 = vmatpush1.msra.mxu0 0.0
  %77 = vmatprep.subr.mxu0 0.0
  %78 = vmatpush1.msra.mxu0 0.0
  %79 = vmatprep.subr.mxu0 0.0
  %80 = vmatpush1.msra.mxu0 0.0
  %81 = vmatprep.subr.mxu0 0.0
  %82 = vmatpush1.msra.mxu0 0.0
  %83 = vmatprep.subr.mxu0 0.0
  %84 = vmatpush1.msra.mxu0 0.0
  %85 = vmatprep.subr.mxu0 0.0
  %86 = vmatpush1.msra.mxu0 0.0
  %87 = vmatprep.subr.mxu0 0.0
  %88 = vmatpush1.msra.mxu0 0.0
  %89 = vmatprep.subr.mxu0 0.0
  %90 = vmatpush1.msra.mxu0 0.0
  %91 = vmatprep.subr.mxu0 0.0
  %92 = vmatpush1.msra.mxu0 0.0
  %93 = vmatprep.subr.mxu0 0.0
  %94 = vmatpush1.msra.mxu0 0.0
  %95 = vmatprep.subr.mxu0 0.0
  %96 = vmatpush1.msra.mxu0 0.0
  %97 = vmatprep.subr.mxu0 0.0
  %98 = vmatpush1.msra.mxu0 0.0
  %99 = vmatprep.subr.mxu0 0.0
  %100 = vmatpush1.msra.mxu0 0.0
  %101 = vmatprep.subr.mxu0 0.0
  %102 = vmatpush1.msra.mxu0 0.0
  %103 = vmatprep.subr.mxu0 0.0
  %104 = vmatpush1.msra.mxu0 0.0
  %105 = vmatprep.subr.mxu0 0.0
  %106 = vmatpush1.msra.mxu0 0.0
  %107 = vmatprep.subr.mxu0 0.0
  %108 = vmatpush1.msra.mxu0 0.0
  %109 = vmatprep.subr.mxu0 0.0
  %110 = vmatpush1.msra.mxu0 0.0
  %111 = vmatprep.subr.mxu0 0.0
  %112 = vmatpush1.msra.mxu0 0.0
  %113 = vmatprep.subr.mxu0 0.0
  %114 = vmatpush1.msra.mxu0 0.0
  %115 = vmatprep.subr.mxu0 0.0
  %116 = vmatpush1.msra.mxu0 0.0
  %117 = vmatprep.subr.mxu0 0.0
  %118 = vmatpush1.msra.mxu0 0.0
  %119 = vmatprep.subr.mxu0 0.0
  %120 = vmatpush1.msra.mxu0 0.0
  %121 = vmatprep.subr.mxu0 0.0
  %122 = vmatpush1.msra.mxu0 0.0
  %123 = vmatprep.subr.mxu0 0.0
  %124 = vmatpush1.msra.mxu0 0.0
  %125 = vmatprep.subr.mxu0 0.0
  %126 = vmatpush1.msra.mxu0 0.0
  %127 = vmatprep.subr.mxu0 0.0
  %128 = vmatpush1.msra.mxu0 0.0
  %129 = vmatprep.subr.mxu0 0.0
  %130 = vmatpush1.msra.mxu0 0.0
  %131 = vmatprep.mubr.f32.mxu0 0.0
  %132 = vmatmul.mubr.f32.gmra.mrb[0].mxu0 %v44
  %v133 = vpop.f32.mrb[0].mxu0
  %v134 = vadd.f32 %v40, %v133
  %v135 = vpop.f32.mrb[0].mxu0
  %136 = vmatprep.mubr.f32.mxu0 0.0
  %137 = vmatmul.mubr.f32.gmra.mrb[0].mxu0 %v47
  %v138 = vpop.f32.mrb[0].mxu0
  %v139 = vadd.f32 %v40, %v138
  %v140 = vpop.f32.mrb[0].mxu0
  %141 = vmatprep.mubr.f32.mxu0 0.0
  %142 = vmatmul.mubr.f32.gmra.mrb[0].mxu0 %v50
  %v143 = vpop.f32.mrb[0].mxu0
  %v144 = vadd.f32 %v40, %v143
  %v145 = vpop.f32.mrb[0].mxu0
  %146 = vmatprep.mubr.f32.mxu0 0.0
  %147 = vmatmul.mubr.f32.gmra.mrb[0].mxu0 %v53
  %v148 = vpop.f32.mrb[0].mxu0
  %v149 = vadd.f32 %v40, %v148
  %v150 = vpop.f32.mrb[0].mxu0
  %151 = vmatprep.mubr.f32.mxu0 0.0
  %152 = vmatmul.mubr.f32.gmra.mrb[0].mxu0 %v56
  %v153 = vpop.f32.mrb[0].mxu0
  %v154 = vadd.f32 %v40, %v153
  %v155 = vpop.f32.mrb[0].mxu0
  %156 = vmatprep.mubr.f32.mxu0 0.0
  %157 = vmatmul.mubr.f32.gmra.mrb[0].mxu0 %v59
  %v158 = vpop.f32.mrb[0].mxu0
  %v159 = vadd.f32 %v40, %v158
  %v160 = vpop.f32.mrb[0].mxu0
  %161 = vmatprep.mubr.f32.mxu0 0.0
  %162 = vmatmul.mubr.f32.gmra.mrb[0].mxu0 %v62
  %v163 = vpop.f32.mrb[0].mxu0
  %v164 = vadd.f32 %v40, %v163
  %v165 = vpop.f32.mrb[0].mxu0
  %166 = vmatprep.mubr.f32.mxu0 0.0
  %167 = vmatmul.mubr.f32.gmra.mrb[0].mxu0 %v65
  %v168 = vpop.f32.mrb[0].mxu0
  %v169 = vadd.f32 %v40, %v168
  %v170 = vpop.f32.mrb[0].mxu0
  %171 = vdwg.mxu0
  %v172 = vtanh.pop %v134
  %v173 = vtanh.pop %v139
  %v174 = vtanh.pop %v144
  %v175 = vtanh.pop %v149
  %v176 = vtanh.pop %v154
  %v177 = vtanh.pop %v159
  %v178 = vtanh.pop %v164
  %v179 = vtanh.pop %v169
  %v180 = vld [vmem:[%s3] sm:$0xff]
  %v181 = vld [vmem:[%s3 + $0x8] sm:$0xff]
  %v182 = vld [vmem:[%s4] sm:$0x1]
  %v184 = vlaneseq
  %v185 = vshrl.u32 %v184, 7
  %v186 = vsub.s32 0, %v185
  %v187 = vrot.slane %v182, %v186
  %vm189 = vcmask 130048
  %v191 = vsel %vm189, %v172, 0
  %v194 = vsel %vm189, %v173, 0
  %v197 = vsel %vm189, %v174, 0
  %v200 = vsel %vm189, %v175, 0
  %v203 = vsel %vm189, %v176, 0
  %v206 = vsel %vm189, %v177, 0
  %v209 = vsel %vm189, %v178, 0
  %v212 = vsel %vm189, %v179, 0
  %214 = vmatprep.subr.mxu0 0.0
  %215 = vmatpush1.msra.mxu0 %v180
  %216 = vmatprep.subr.mxu0 0.0
  %217 = vmatpush1.msra.mxu0 %v181
  %218 = vmatprep.subr.mxu0 0.0
  %219 = vmatpush1.msra.mxu0 0.0
  %220 = vmatprep.subr.mxu0 0.0
  %221 = vmatpush1.msra.mxu0 0.0
  %222 = vmatprep.subr.mxu0 0.0
  %223 = vmatpush1.msra.mxu0 0.0
  %224 = vmatprep.subr.mxu0 0.0
  %225 = vmatpush1.msra.mxu0 0.0
  %226 = vmatprep.subr.mxu0 0.0
  %227 = vmatpush1.msra.mxu0 0.0
  %228 = vmatprep.subr.mxu0 0.0
  %229 = vmatpush1.msra.mxu0 0.0
  %230 = vmatprep.subr.mxu0 0.0
  %231 = vmatpush1.msra.mxu0 0.0
  %232 = vmatprep.subr.mxu0 0.0
  %233 = vmatpush1.msra.mxu0 0.0
  %234 = vmatprep.subr.mxu0 0.0
  %235 = vmatpush1.msra.mxu0 0.0
  %236 = vmatprep.subr.mxu0 0.0
  %237 = vmatpush1.msra.mxu0 0.0
  %238 = vmatprep.subr.mxu0 0.0
  %239 = vmatpush1.msra.mxu0 0.0
  %240 = vmatprep.subr.mxu0 0.0
  %241 = vmatpush1.msra.mxu0 0.0
  %242 = vmatprep.subr.mxu0 0.0
  %243 = vmatpush1.msra.mxu0 0.0
  %244 = vmatprep.subr.mxu0 0.0
  %245 = vmatpush1.msra.mxu0 0.0
  %246 = vmatprep.subr.mxu0 0.0
  %247 = vmatpush1.msra.mxu0 0.0
  %248 = vmatprep.subr.mxu0 0.0
  %249 = vmatpush1.msra.mxu0 0.0
  %250 = vmatprep.subr.mxu0 0.0
  %251 = vmatpush1.msra.mxu0 0.0
  %252 = vmatprep.subr.mxu0 0.0
  %253 = vmatpush1.msra.mxu0 0.0
  %254 = vmatprep.subr.mxu0 0.0
  %255 = vmatpush1.msra.mxu0 0.0
  %256 = vmatprep.subr.mxu0 0.0
  %257 = vmatpush1.msra.mxu0 0.0
  %258 = vmatprep.subr.mxu0 0.0
  %259 = vmatpush1.msra.mxu0 0.0
  %260 = vmatprep.subr.mxu0 0.0
  %261 = vmatpush1.msra.mxu0 0.0
  %262 = vmatprep.subr.mxu0 0.0
  %263 = vmatpush1.msra.mxu0 0.0
  %264 = vmatprep.subr.mxu0 0.0
  %265 = vmatpush1.msra.mxu0 0.0
  %266 = vmatprep.subr.mxu0 0.0
  %267 = vmatpush1.msra.mxu0 0.0
  %268 = vmatprep.subr.mxu0 0.0
  %269 = vmatpush1.msra.mxu0 0.0
  %270 = vmatprep.subr.mxu0 0.0
  %271 = vmatpush1.msra.mxu0 0.0
  %272 = vmatprep.subr.mxu0 0.0
  %273 = vmatpush1.msra.mxu0 0.0
  %274 = vmatprep.subr.mxu0 0.0
  %275 = vmatpush1.msra.mxu0 0.0
  %276 = vmatprep.subr.mxu0 0.0
  %277 = vmatpush1.msra.mxu0 0.0
  %278 = vmatprep.mubr.f32.mxu0 0.0
  %279 = vmatmul.mubr.f32.gmra.mrb[0].mxu0 %v191
  %v280 = vpop.f32.mrb[0].mxu0
  %v281 = vadd.f32 %v187, %v280
  %v282 = vpop.f32.mrb[0].mxu0
  %283 = vmatprep.mubr.f32.mxu0 0.0
  %284 = vmatmul.mubr.f32.gmra.mrb[0].mxu0 %v194
  %v285 = vpop.f32.mrb[0].mxu0
  %v286 = vadd.f32 %v187, %v285
  %v287 = vpop.f32.mrb[0].mxu0
  %288 = vmatprep.mubr.f32.mxu0 0.0
  %289 = vmatmul.mubr.f32.gmra.mrb[0].mxu0 %v197
  %v290 = vpop.f32.mrb[0].mxu0
  %v291 = vadd.f32 %v187, %v290
  %v292 = vpop.f32.mrb[0].mxu0
  %293 = vmatprep.mubr.f32.mxu0 0.0
  %294 = vmatmul.mubr.f32.gmra.mrb[0].mxu0 %v200
  %v295 = vpop.f32.mrb[0].mxu0
  %v296 = vadd.f32 %v187, %v295
  %v297 = vpop.f32.mrb[0].mxu0
  %298 = vmatprep.mubr.f32.mxu0 0.0
  %299 = vmatmul.mubr.f32.gmra.mrb[0].mxu0 %v203
  %v300 = vpop.f32.mrb[0].mxu0
  %v301 = vadd.f32 %v187, %v300
  %v302 = vpop.f32.mrb[0].mxu0
  %303 = vmatprep.mubr.f32.mxu0 0.0
  %304 = vmatmul.mubr.f32.gmra.mrb[0].mxu0 %v206
  %v305 = vpop.f32.mrb[0].mxu0
  %v306 = vadd.f32 %v187, %v305
  %v307 = vpop.f32.mrb[0].mxu0
  %308 = vmatprep.mubr.f32.mxu0 0.0
  %309 = vmatmul.mubr.f32.gmra.mrb[0].mxu0 %v209
  %v310 = vpop.f32.mrb[0].mxu0
  %v311 = vadd.f32 %v187, %v310
  %v312 = vpop.f32.mrb[0].mxu0
  %313 = vmatprep.mubr.f32.mxu0 0.0
  %314 = vmatmul.mubr.f32.gmra.mrb[0].mxu0 %v212
  %v315 = vpop.f32.mrb[0].mxu0
  %v316 = vadd.f32 %v187, %v315
  %v317 = vpop.f32.mrb[0].mxu0
  %318 = vdwg.mxu0
  %v319 = vtanh.pop %v281
  %v320 = vtanh.pop %v286
  %v321 = vtanh.pop %v291
  %v322 = vtanh.pop %v296
  %v323 = vtanh.pop %v301
  %v324 = vtanh.pop %v306
  %v325 = vtanh.pop %v311
  %v326 = vtanh.pop %v316
  %v327 = vld [vmem:[%s5] sm:$0xff]
  %v328 = vld [vmem:[%s5 + $0x8] sm:$0xff]
  %v329 = vld [vmem:[%s5 + $0x10] sm:$0xff]
  %v330 = vld [vmem:[%s5 + $0x18] sm:$0xff]
  %v331 = vld [vmem:[%s6] sm:$0x1]
  %v333 = vlaneseq
  %v334 = vshrl.u32 %v333, 7
  %v335 = vsub.s32 0, %v334
  %v336 = vrot.slane %v331, %v335
  %vm338 = vcmask 261120
  %v340 = vsel %vm338, %v319, 0
  %v343 = vsel %vm338, %v320, 0
  %v346 = vsel %vm338, %v321, 0
  %v349 = vsel %vm338, %v322, 0
  %v352 = vsel %vm338, %v323, 0
  %v355 = vsel %vm338, %v324, 0
  %v358 = vsel %vm338, %v325, 0
  %v361 = vsel %vm338, %v326, 0
  %363 = vmatprep.subr.mxu0 0.0
  %364 = vmatpush1.msra.mxu0 %v327
  %365 = vmatprep.subr.mxu0 0.0
  %366 = vmatpush1.msra.mxu0 %v328
  %367 = vmatprep.subr.mxu0 0.0
  %368 = vmatpush1.msra.mxu0 %v329
  %369 = vmatprep.subr.mxu0 0.0
  %370 = vmatpush1.msra.mxu0 %v330
  %371 = vmatprep.subr.mxu0 0.0
  %372 = vmatpush1.msra.mxu0 0.0
  %373 = vmatprep.subr.mxu0 0.0
  %374 = vmatpush1.msra.mxu0 0.0
  %375 = vmatprep.subr.mxu0 0.0
  %376 = vmatpush1.msra.mxu0 0.0
  %377 = vmatprep.subr.mxu0 0.0
  %378 = vmatpush1.msra.mxu0 0.0
  %379 = vmatprep.subr.mxu0 0.0
  %380 = vmatpush1.msra.mxu0 0.0
  %381 = vmatprep.subr.mxu0 0.0
  %382 = vmatpush1.msra.mxu0 0.0
  %383 = vmatprep.subr.mxu0 0.0
  %384 = vmatpush1.msra.mxu0 0.0
  %385 = vmatprep.subr.mxu0 0.0
  %386 = vmatpush1.msra.mxu0 0.0
  %387 = vmatprep.subr.mxu0 0.0
  %388 = vmatpush1.msra.mxu0 0.0
  %389 = vmatprep.subr.mxu0 0.0
  %390 = vmatpush1.msra.mxu0 0.0
  %391 = vmatprep.subr.mxu0 0.0
  %392 = vmatpush1.msra.mxu0 0.0
  %393 = vmatprep.subr.mxu0 0.0
  %394 = vmatpush1.msra.mxu0 0.0
  %395 = vmatprep.subr.mxu0 0.0
  %396 = vmatpush1.msra.mxu0 0.0
  %397 = vmatprep.subr.mxu0 0.0
  %398 = vmatpush1.msra.mxu0 0.0
  %399 = vmatprep.subr.mxu0 0.0
  %400 = vmatpush1.msra.mxu0 0.0
  %401 = vmatprep.subr.mxu0 0.0
  %402 = vmatpush1.msra.mxu0 0.0
  %403 = vmatprep.subr.mxu0 0.0
  %404 = vmatpush1.msra.mxu0 0.0
  %405 = vmatprep.subr.mxu0 0.0
  %406 = vmatpush1.msra.mxu0 0.0
  %407 = vmatprep.subr.mxu0 0.0
  %408 = vmatpush1.msra.mxu0 0.0
  %409 = vmatprep.subr.mxu0 0.0
  %410 = vmatpush1.msra.mxu0 0.0
  %411 = vmatprep.subr.mxu0 0.0
  %412 = vmatpush1.msra.mxu0 0.0
  %413 = vmatprep.subr.mxu0 0.0
  %414 = vmatpush1.msra.mxu0 0.0
  %415 = vmatprep.subr.mxu0 0.0
  %416 = vmatpush1.msra.mxu0 0.0
  %417 = vmatprep.subr.mxu0 0.0
  %418 = vmatpush1.msra.mxu0 0.0
  %419 = vmatprep.subr.mxu0 0.0
  %420 = vmatpush1.msra.mxu0 0.0
  %421 = vmatprep.subr.mxu0 0.0
  %422 = vmatpush1.msra.mxu0 0.0
  %423 = vmatprep.subr.mxu0 0.0
  %424 = vmatpush1.msra.mxu0 0.0
  %425 = vmatprep.subr.mxu0 0.0
  %426 = vmatpush1.msra.mxu0 0.0
  %427 = vmatprep.mubr.f32.mxu0 0.0
  %428 = vmatmul.mubr.f32.gmra.mrb[0].mxu0 %v340
  %v429 = vpop.f32.mrb[0].mxu0
  %v430 = vadd.f32 %v336, %v429
  %v431 = vpop.f32.mrb[0].mxu0
  %432 = vmatprep.mubr.f32.mxu0 0.0
  %433 = vmatmul.mubr.f32.gmra.mrb[0].mxu0 %v343
  %v434 = vpop.f32.mrb[0].mxu0
  %v435 = vadd.f32 %v336, %v434
  %v436 = vpop.f32.mrb[0].mxu0
  %437 = vmatprep.mubr.f32.mxu0 0.0
  %438 = vmatmul.mubr.f32.gmra.mrb[0].mxu0 %v346
  %v439 = vpop.f32.mrb[0].mxu0
  %v440 = vadd.f32 %v336, %v439
  %v441 = vpop.f32.mrb[0].mxu0
  %442 = vmatprep.mubr.f32.mxu0 0.0
  %443 = vmatmul.mubr.f32.gmra.mrb[0].mxu0 %v349
  %v444 = vpop.f32.mrb[0].mxu0
  %v445 = vadd.f32 %v336, %v444
  %v446 = vpop.f32.mrb[0].mxu0
  %447 = vmatprep.mubr.f32.mxu0 0.0
  %448 = vmatmul.mubr.f32.gmra.mrb[0].mxu0 %v352
  %v449 = vpop.f32.mrb[0].mxu0
  %v450 = vadd.f32 %v336, %v449
  %v451 = vpop.f32.mrb[0].mxu0
  %452 = vmatprep.mubr.f32.mxu0 0.0
  %453 = vmatmul.mubr.f32.gmra.mrb[0].mxu0 %v355
  %v454 = vpop.f32.mrb[0].mxu0
  %v455 = vadd.f32 %v336, %v454
  %v456 = vpop.f32.mrb[0].mxu0
  %457 = vmatprep.mubr.f32.mxu0 0.0
  %458 = vmatmul.mubr.f32.gmra.mrb[0].mxu0 %v358
  %v459 = vpop.f32.mrb[0].mxu0
  %v460 = vadd.f32 %v336, %v459
  %v461 = vpop.f32.mrb[0].mxu0
  %462 = vmatprep.mubr.f32.mxu0 0.0
  %463 = vmatmul.mubr.f32.gmra.mrb[0].mxu0 %v361
  %v464 = vpop.f32.mrb[0].mxu0
  %v465 = vadd.f32 %v336, %v464
  %v466 = vpop.f32.mrb[0].mxu0
  %467 = vdwg.mxu0
  %v468 = vtanh.pop %v430
  %v469 = vtanh.pop %v435
  %v470 = vtanh.pop %v440
  %v471 = vtanh.pop %v445
  %v472 = vtanh.pop %v450
  %v473 = vtanh.pop %v455
  %v474 = vtanh.pop %v460
  %v475 = vtanh.pop %v465
  %vm476 = vcmask 31744
  %v477 = vsel %vm476, %v468, -inf
  %478 = vmax.xlane.f32.xlu0 %v477
  %v479 = vpop.xlane.xlu0 %478
  %v480 = vsel %vm476, %v469, -inf
  %481 = vmax.xlane.f32.xlu0 %v480
  %v482 = vpop.xlane.xlu0 %481
  %v483 = vsel %vm476, %v470, -inf
  %484 = vmax.xlane.f32.xlu0 %v483
  %v485 = vpop.xlane.xlu0 %484
  %v486 = vsel %vm476, %v471, -inf
  %487 = vmax.xlane.f32.xlu0 %v486
  %v488 = vpop.xlane.xlu0 %487
  %v489 = vsel %vm476, %v472, -inf
  %490 = vmax.xlane.f32.xlu0 %v489
  %v491 = vpop.xlane.xlu0 %490
  %v492 = vsel %vm476, %v473, -inf
  %493 = vmax.xlane.f32.xlu0 %v492
  %v494 = vpop.xlane.xlu0 %493
  %v495 = vsel %vm476, %v474, -inf
  %496 = vmax.xlane.f32.xlu0 %v495
  %v497 = vpop.xlane.xlu0 %496
  %v498 = vsel %vm476, %v475, -inf
  %499 = vmax.xlane.f32.xlu0 %v498
  %v500 = vpop.xlane.xlu0 %499
  %v501 = vsub.f32 %v468, %v479
  %v502 = vsub.f32 %v469, %v482
  %v503 = vsub.f32 %v470, %v485
  %v504 = vsub.f32 %v471, %v488
  %v505 = vsub.f32 %v472, %v491
  %v506 = vsub.f32 %v473, %v494
  %v507 = vsub.f32 %v474, %v497
  %v508 = vsub.f32 %v475, %v500
  %v509 = vmul.f32 %v501, 1.442695
  %v510 = vpow.pop %v509
  %v511 = vmul.f32 %v502, 1.442695
  %v512 = vpow.pop %v511
  %v513 = vmul.f32 %v503, 1.442695
  %v514 = vpow.pop %v513
  %v515 = vmul.f32 %v504, 1.442695
  %v516 = vpow.pop %v515
  %v517 = vmul.f32 %v505, 1.442695
  %v518 = vpow.pop %v517
  %v519 = vmul.f32 %v506, 1.442695
  %v520 = vpow.pop %v519
  %v521 = vmul.f32 %v507, 1.442695
  %v522 = vpow.pop %v521
  %v523 = vmul.f32 %v508, 1.442695
  %v524 = vpow.pop %v523
  %v525 = vsel %vm476, %v510, 0.0
  %526 = vadd.xlane.f32.xlu0 %v525
  %v527 = vpop.xlane.xlu0 %526
  %v528 = vsel %vm476, %v512, 0.0
  %529 = vadd.xlane.f32.xlu0 %v528
  %v530 = vpop.xlane.xlu0 %529
  %v531 = vsel %vm476, %v514, 0.0
  %532 = vadd.xlane.f32.xlu0 %v531
  %v533 = vpop.xlane.xlu0 %532
  %v534 = vsel %vm476, %v516, 0.0
  %535 = vadd.xlane.f32.xlu0 %v534
  %v536 = vpop.xlane.xlu0 %535
  %v537 = vsel %vm476, %v518, 0.0
  %538 = vadd.xlane.f32.xlu0 %v537
  %v539 = vpop.xlane.xlu0 %538
  %v540 = vsel %vm476, %v520, 0.0
  %541 = vadd.xlane.f32.xlu0 %v540
  %v542 = vpop.xlane.xlu0 %541
  %v543 = vsel %vm476, %v522, 0.0
  %544 = vadd.xlane.f32.xlu0 %v543
  %v545 = vpop.xlane.xlu0 %544
  %v546 = vsel %vm476, %v524, 0.0
  %547 = vadd.xlane.f32.xlu0 %v546
  %v548 = vpop.xlane.xlu0 %547
  %v549 = vrcp.pop %v527
  %v550 = vmul.f32 %v510, %v549
  %v551 = vrcp.pop %v530
  %v552 = vmul.f32 %v512, %v551
  %v553 = vrcp.pop %v533
  %v554 = vmul.f32 %v514, %v553
  %v555 = vrcp.pop %v536
  %v556 = vmul.f32 %v516, %v555
  %v557 = vrcp.pop %v539
  %v558 = vmul.f32 %v518, %v557
  %v559 = vrcp.pop %v542
  %v560 = vmul.f32 %v520, %v559
  %v561 = vrcp.pop %v545
  %v562 = vmul.f32 %v522, %v561
  %v563 = vrcp.pop %v548
  %v564 = vmul.f32 %v524, %v563
  %565 = vst.msk [vmem:[%s7] sm:$0xff] %vm476, %v550
  %566 = vst.msk [vmem:[%s7 + $0x8] sm:$0xff] %vm476, %v552
  %567 = vst.msk [vmem:[%s7 + $0x10] sm:$0xff] %vm476, %v554
  %568 = vst.msk [vmem:[%s7 + $0x18] sm:$0xff] %vm476, %v556
  %569 = vst.msk [vmem:[%s7 + $0x20] sm:$0xff] %vm476, %v558
  %570 = vst.msk [vmem:[%s7 + $0x28] sm:$0xff] %vm476, %v560
  %571 = vst.msk [vmem:[%s7 + $0x30] sm:$0xff] %vm476, %v562
  %572 = vst.msk [vmem:[%s7 + $0x38] sm:$0xff] %vm476, %v564
  // Predicated region
  $region30: #{tpu_custom_call.1} parent=0 // pred_check
    _
  $region31: #{tpu_custom_call.1} parent=0 // pred_check_branch
    %574 = sbr.rel (0) target = $region33
  $region32: #{tpu_custom_call.1} parent=0 // pred_region
    _
  $region33: #{tpu_custom_call.1} parent=0 // pred_fallthru
    _
  // Predicated region
  $region34: #{tpu_custom_call.1} parent=0 // pred_check
    _
  $region35: #{tpu_custom_call.1} parent=0 // pred_check_branch
    %576 = sbr.rel (0) target = $region37
  $region36: #{tpu_custom_call.1} parent=0 // pred_region
    _
  $region37: #{tpu_custom_call.1} parent=0 // pred_fallthru
    _

</llo_original>
